<compile_context>
chip_gen: v5e
topology: v5e:2x2
jax: 0.10.0
libtpu: 0.0.40
codegen_flags: <defaults>
</compile_context>

<pallas_src>
import jax
import jax.numpy as jnp
from jax.experimental import pallas as pl
from jax.experimental.pallas import tpu as pltpu

H1_PAD = 256    # hidden 250 -> 256
H2_PAD = 128    # hidden 100 -> 128
OUT_PAD = 128   # output 4   -> 128 (lane-dense output slab; sliced in wrapper)

# Sized against v7x's 64 MiB VMEM (per-tile buffers here are tiny, so this is
# conservative for v5e/v6e's 128 MiB as well).
DEFAULT_TILE_B = 1024


def _round_up(n, m):
    return ((n + m - 1) // m) * m


def mlp_kernel(x_ref, w1_ref, b1_ref, w2_ref, b2_ref, w3_ref, b3_ref, o_ref):
    """One batch tile of the 3-layer MLP.

    Matmuls run bf16 x bf16 -> f32 on the MXU; bias adds / ReLU stay f32 on
    the VPU.  Weights & biases are VMEM-resident across grid iterations.
    """
    # layer1 + ReLU
    h1 = jnp.dot(x_ref[...], w1_ref[...], preferred_element_type=jnp.float32)
    h1 = jnp.maximum(h1 + b1_ref[...], 0.0)
    # layer2 + ReLU
    h2 = jnp.dot(h1.astype(w2_ref.dtype), w2_ref[...],
                 preferred_element_type=jnp.float32)
    h2 = jnp.maximum(h2 + b2_ref[...], 0.0)
    # layer3 (no activation), lane-dense padded output store
    out = jnp.dot(h2.astype(w3_ref.dtype), w3_ref[...],
                  preferred_element_type=jnp.float32)
    o_ref[...] = (out + b3_ref[...]).astype(o_ref.dtype)


def stock_predictor_forward(x, params, output_size, *, tile_b=DEFAULT_TILE_B):
    """x: [B, input_size] f32.  params: padded, pre-transposed weights/biases."""
    B, F = x.shape
    w1, b1 = params["w1"], params["b1"]
    w2, b2 = params["w2"], params["b2"]
    w3, b3 = params["w3"], params["b3"]

    # Pad the batch so the grid covers it cleanly; tiny demo batches collapse
    # to a single tile.
    b_pad = _round_up(B, 8)
    tb = min(tile_b, b_pad)
    b_pad = _round_up(b_pad, tb)
    xp = x if b_pad == B else jnp.pad(x, ((0, b_pad - B), (0, 0)))
    xp = xp.astype(jnp.bfloat16)   # MXU-native operand dtype, halves x DMA bytes

    grid = (b_pad // tb,)

    flops = 2 * b_pad * (F * H1_PAD + H1_PAD * H2_PAD + H2_PAD * OUT_PAD)
    bytes_accessed = (
        xp.size * xp.dtype.itemsize
        + b_pad * OUT_PAD * 4
        + sum(p.size * p.dtype.itemsize for p in (w1, b1, w2, b2, w3, b3)))

    out_padded = pl.pallas_call(
        mlp_kernel,
        out_shape=jax.ShapeDtypeStruct((b_pad, OUT_PAD), jnp.float32),
        grid=grid,
        in_specs=[
            pl.BlockSpec((tb, F), lambda i: (i, 0)),        # x: streamed per tile
            pl.BlockSpec(w1.shape, lambda i: (0, 0)),       # weights/biases resident
            pl.BlockSpec(b1.shape, lambda i: (0, 0)),
            pl.BlockSpec(w2.shape, lambda i: (0, 0)),
            pl.BlockSpec(b2.shape, lambda i: (0, 0)),
            pl.BlockSpec(w3.shape, lambda i: (0, 0)),
            pl.BlockSpec(b3.shape, lambda i: (0, 0)),
        ],
        out_specs=pl.BlockSpec((tb, OUT_PAD), lambda i: (i, 0)),
        compiler_params=pltpu.CompilerParams(
            dimension_semantics=("parallel",),              # megacore on v7x
            vmem_limit_bytes=32 * 1024 * 1024,
        ),
        cost_estimate=pl.CostEstimate(
            flops=flops, transcendentals=0, bytes_accessed=bytes_accessed),
    )(xp, w1, b1, w2, b2, w3, b3)

    return out_padded[:B, :output_size]


def init_params(key, input_size, output_size):
    """nn.Linear-style init (U(+/- 1/sqrt(fan_in))), stored as [in, out]
    (i.e. W^T vs PyTorch's [out, in]) and zero-padded to lane-aligned sizes.
    Padding is zeros so the padded network computes exactly the same values."""
    dims = [
        # (fan_in, fan_out, padded_in, padded_out)
        (input_size, 250, input_size, H1_PAD),
        (250, 100, H1_PAD, H2_PAD),
        (100, output_size, H2_PAD, OUT_PAD),
    ]
    params = {}
    for i, (fan_in, fan_out, in_pad, out_pad) in enumerate(dims, start=1):
        key, kw, kb = jax.random.split(key, 3)
        bound = 1.0 / float(jnp.sqrt(jnp.float32(fan_in)))
        w = jax.random.uniform(kw, (fan_in, fan_out), jnp.float32, -bound, bound)
        b = jax.random.uniform(kb, (1, fan_out), jnp.float32, -bound, bound)
        w = jnp.pad(w, ((0, in_pad - fan_in), (0, out_pad - fan_out)))
        b = jnp.pad(b, ((0, 0), (0, out_pad - fan_out)))
        params[f"w{i}"] = w.astype(jnp.bfloat16)   # MXU operands in bf16
        params[f"b{i}"] = b                        # biases stay f32 (VPU adds)
    return params


def reference_forward(x, params, output_size):
    """Pure-JAX reference mirroring the kernel's dtype choices
    (bf16 operands, f32 accumulation / elementwise)."""
    xb = x.astype(jnp.bfloat16)
    h1 = jnp.maximum(
        jnp.dot(xb, params["w1"], preferred_element_type=jnp.float32)
        + params["b1"], 0.0)
    h2 = jnp.maximum(
        jnp.dot(h1.astype(jnp.bfloat16), params["w2"],
                preferred_element_type=jnp.float32) + params["b2"], 0.0)
    out = (jnp.dot(h2.astype(jnp.bfloat16), params["w3"],
                   preferred_element_type=jnp.float32) + params["b3"])
    return out[:, :output_size]


if __name__ == "__main__":
    input_size = 32
    output_size = 4
    batch = 8

    key = jax.random.PRNGKey(0)
    key, kx = jax.random.split(key)
    x = jax.random.normal(kx, (batch, input_size), jnp.float32)
    params = init_params(key, input_size, output_size)

    out = stock_predictor_forward(x, params, output_size)
    out = jax.block_until_ready(out)

    ref = reference_forward(x, params, output_size)
    assert out.shape == (batch, output_size), out.shape
    assert jnp.allclose(out, ref, atol=1e-3, rtol=1e-3), float(
        jnp.max(jnp.abs(out - ref)))

    print("KERNEL_OK")
</pallas_src>

<mosaic_0001>
module attributes {stable_mosaic.version = 11 : i64} {
  func.func @mlp_kernel(%arg0: i32, %arg1: memref<8x32xbf16, #tpu.memory_space<vmem>>, %arg2: memref<32x256xbf16, #tpu.memory_space<vmem>>, %arg3: memref<1x256xf32, #tpu.memory_space<vmem>>, %arg4: memref<256x128xbf16, #tpu.memory_space<vmem>>, %arg5: memref<1x128xf32, #tpu.memory_space<vmem>>, %arg6: memref<128x128xbf16, #tpu.memory_space<vmem>>, %arg7: memref<1x128xf32, #tpu.memory_space<vmem>>, %arg8: memref<8x128xf32, #tpu.memory_space<vmem>>) attributes {dimension_semantics = [#tpu.dimension_semantics<parallel>], iteration_bounds = array<i64: 1>, scalar_prefetch = 0 : i64, scratch_operands = 0 : i64, tpu.core_type = #tpu.core_type<tc>, window_params = [{transform_indices = @transform_0, window_bounds = array<i64: 8, 32>}, {pipeline_mode = #tpu.pipeline_mode<synchronous>, transform_indices = @transform_1, window_bounds = array<i64: 32, 256>}, {pipeline_mode = #tpu.pipeline_mode<synchronous>, transform_indices = @transform_2, window_bounds = array<i64: 1, 256>}, {pipeline_mode = #tpu.pipeline_mode<synchronous>, transform_indices = @transform_3, window_bounds = array<i64: 256, 128>}, {pipeline_mode = #tpu.pipeline_mode<synchronous>, transform_indices = @transform_4, window_bounds = array<i64: 1, 128>}, {pipeline_mode = #tpu.pipeline_mode<synchronous>, transform_indices = @transform_5, window_bounds = array<i64: 128, 128>}, {pipeline_mode = #tpu.pipeline_mode<synchronous>, transform_indices = @transform_6, window_bounds = array<i64: 1, 128>}, {transform_indices = @transform_7, window_bounds = array<i64: 8, 128>}]} {
    %c0 = arith.constant 0 : index
    %c0_0 = arith.constant 0 : index
    %0 = vector.load %arg1[%c0, %c0_0] : memref<8x32xbf16, #tpu.memory_space<vmem>>, vector<8x32xbf16>
    %c0_1 = arith.constant 0 : index
    %c0_2 = arith.constant 0 : index
    %1 = vector.load %arg2[%c0_1, %c0_2] : memref<32x256xbf16, #tpu.memory_space<vmem>>, vector<32x256xbf16>
    %cst = arith.constant dense<0.000000e+00> : vector<8x256xf32>
    %2 = tpu.matmul %0, %1, %cst {dimension_numbers = #tpu.dot_dimension_numbers<[1], [0], [0], [1], [0, 0, 1, 1], [], []>} : vector<8x32xbf16>, vector<32x256xbf16>, vector<8x256xf32> -> vector<8x256xf32>
    %c0_3 = arith.constant 0 : index
    %c0_4 = arith.constant 0 : index
    %3 = vector.load %arg3[%c0_3, %c0_4] : memref<1x256xf32, #tpu.memory_space<vmem>>, vector<1x256xf32>
    %4 = vector.broadcast %3 : vector<1x256xf32> to vector<8x256xf32>
    %5 = arith.addf %2, %4 : vector<8x256xf32>
    %cst_5 = arith.constant 0.000000e+00 : f32
    %6 = vector.broadcast %cst_5 : f32 to vector<8x256xf32>
    %7 = arith.maximumf %5, %6 : vector<8x256xf32>
    %8 = arith.truncf %7 : vector<8x256xf32> to vector<8x256xbf16>
    %c0_6 = arith.constant 0 : index
    %c0_7 = arith.constant 0 : index
    %9 = vector.load %arg4[%c0_6, %c0_7] : memref<256x128xbf16, #tpu.memory_space<vmem>>, vector<256x128xbf16>
    %cst_8 = arith.constant dense<0.000000e+00> : vector<8x128xf32>
    %10 = tpu.matmul %8, %9, %cst_8 {dimension_numbers = #tpu.dot_dimension_numbers<[1], [0], [0], [1], [0, 0, 1, 1], [], []>} : vector<8x256xbf16>, vector<256x128xbf16>, vector<8x128xf32> -> vector<8x128xf32>
    %c0_9 = arith.constant 0 : index
    %c0_10 = arith.constant 0 : index
    %11 = vector.load %arg5[%c0_9, %c0_10] : memref<1x128xf32, #tpu.memory_space<vmem>>, vector<1x128xf32>
    %12 = vector.broadcast %11 : vector<1x128xf32> to vector<8x128xf32>
    %13 = arith.addf %10, %12 : vector<8x128xf32>
    %cst_11 = arith.constant 0.000000e+00 : f32
    %14 = vector.broadcast %cst_11 : f32 to vector<8x128xf32>
    %15 = arith.maximumf %13, %14 : vector<8x128xf32>
    %16 = arith.truncf %15 : vector<8x128xf32> to vector<8x128xbf16>
    %c0_12 = arith.constant 0 : index
    %c0_13 = arith.constant 0 : index
    %17 = vector.load %arg6[%c0_12, %c0_13] : memref<128x128xbf16, #tpu.memory_space<vmem>>, vector<128x128xbf16>
    %cst_14 = arith.constant dense<0.000000e+00> : vector<8x128xf32>
    %18 = tpu.matmul %16, %17, %cst_14 {dimension_numbers = #tpu.dot_dimension_numbers<[1], [0], [0], [1], [0, 0, 1, 1], [], []>} : vector<8x128xbf16>, vector<128x128xbf16>, vector<8x128xf32> -> vector<8x128xf32>
    %c0_15 = arith.constant 0 : index
    %c0_16 = arith.constant 0 : index
    %19 = vector.load %arg7[%c0_15, %c0_16] : memref<1x128xf32, #tpu.memory_space<vmem>>, vector<1x128xf32>
    %20 = vector.broadcast %19 : vector<1x128xf32> to vector<8x128xf32>
    %21 = arith.addf %18, %20 : vector<8x128xf32>
    %c0_17 = arith.constant 0 : index
    %c0_18 = arith.constant 0 : index
    %22 = vector.load %arg8[%c0_17, %c0_18] : memref<8x128xf32, #tpu.memory_space<vmem>>, vector<8x128xf32>
    tpu.vector_store %arg8[%c0_17, %c0_18], %21 {strides = array<i32>} : memref<8x128xf32, #tpu.memory_space<vmem>>, vector<8x128xf32>,
    return
  }
  func.func @transform_0(%arg0: i32) -> (i32, i32) {
    %c0_i32 = arith.constant 0 : i32
    %c0_i32_0 = arith.constant 0 : i32
    return %arg0, %c0_i32 : i32, i32
  }
  func.func @transform_1(%arg0: i32) -> (i32, i32) {
    %c0_i32 = arith.constant 0 : i32
    %c0_i32_0 = arith.constant 0 : i32
    %c0_i32_1 = arith.constant 0 : i32
    return %c0_i32, %c0_i32_0 : i32, i32
  }
  func.func @transform_2(%arg0: i32) -> (i32, i32) {
    %c0_i32 = arith.constant 0 : i32
    %c0_i32_0 = arith.constant 0 : i32
    %c0_i32_1 = arith.constant 0 : i32
    return %c0_i32, %c0_i32_0 : i32, i32
  }
  func.func @transform_3(%arg0: i32) -> (i32, i32) {
    %c0_i32 = arith.constant 0 : i32
    %c0_i32_0 = arith.constant 0 : i32
    %c0_i32_1 = arith.constant 0 : i32
    return %c0_i32, %c0_i32_0 : i32, i32
  }
  func.func @transform_4(%arg0: i32) -> (i32, i32) {
    %c0_i32 = arith.constant 0 : i32
    %c0_i32_0 = arith.constant 0 : i32
    %c0_i32_1 = arith.constant 0 : i32
    return %c0_i32, %c0_i32_0 : i32, i32
  }
  func.func @transform_5(%arg0: i32) -> (i32, i32) {
    %c0_i32 = arith.constant 0 : i32
    %c0_i32_0 = arith.constant 0 : i32
    %c0_i32_1 = arith.constant 0 : i32
    return %c0_i32, %c0_i32_0 : i32, i32
  }
  func.func @transform_6(%arg0: i32) -> (i32, i32) {
    %c0_i32 = arith.constant 0 : i32
    %c0_i32_0 = arith.constant 0 : i32
    %c0_i32_1 = arith.constant 0 : i32
    return %c0_i32, %c0_i32_0 : i32, i32
  }
  func.func @transform_7(%arg0: i32) -> (i32, i32) {
    %c0_i32 = arith.constant 0 : i32
    %c0_i32_0 = arith.constant 0 : i32
    return %arg0, %c0_i32 : i32, i32
  }
}

</mosaic_0001>

<llo_original>
// kernel: tpu_custom_call.1
$region0: #{tpu_custom_call.1}
  #allocation0 [shape = 'u32[]', space=smem, size = 0x4, offset = 0x4, fixed_abs, tag = 'smem constant byte address 0x4 - core index']
  #allocation1 [shape = 'u32[72,128]{1,0:T(1,128)}', space=vmem, size = 0x9000, scoped, tag = 'internal scratch']
  %s0 = inlined_call_operand.hbm [shape: bf16[8,32], index: 0, kind: input, shape index: {}]
  %s1 = inlined_call_operand.hbm [shape: bf16[32,256], index: 1, kind: input, shape index: {}]
  %s2 = inlined_call_operand.hbm [shape: f32[1,256], index: 2, kind: input, shape index: {}]
  %s3 = inlined_call_operand.hbm [shape: bf16[256,128], index: 3, kind: input, shape index: {}]
  %s4 = inlined_call_operand.vmem [shape: f32[1,128], index: 4, kind: input, shape index: {}]
  %s5 = inlined_call_operand.hbm [shape: bf16[128,128], index: 5, kind: input, shape index: {}]
  %s6 = inlined_call_operand.vmem [shape: f32[1,128], index: 6, kind: input, shape index: {}]
  %s7 = inlined_call_operand.hbm [shape: f32[8,128], index: 7, kind: output, shape index: {}]
  %s8 = sld [smem:[#allocation0]]
  $region58: #{tpu_custom_call.1} parent=0
    _
  %s10 = ssub.s32 1, %s8
  %s11 = scalar_select 0, %s10, %s8
  $region1: #{tpu_custom_call.1} parent=0
    #allocation2 [shape = 'u8[2048]{0}', space=vmem, size = 0x800, scoped, tag = 'input window, operand 0, single buffered']
    #allocation3 [shape = 's32[1]{0}', space=sflag, size = 0x4, scoped, tag = 'scoped memory for tpu_custom_call.1']
    #allocation4 [shape = 's32[1]{0}', space=sflag, size = 0x4, scoped, tag = 'scoped memory for tpu_custom_call.1']
    #allocation5 [shape = 'u8[16384]{0}', space=vmem, size = 0x4000, scoped, tag = 'input window, operand 1, single buffered']
    #allocation6 [shape = 's32[1]{0}', space=sflag, size = 0x4, scoped, tag = 'scoped memory for tpu_custom_call.1']
    #allocation7 [shape = 'u8[1024]{0}', space=vmem, size = 0x400, scoped, tag = 'input window, operand 2, single buffered']
    #allocation8 [shape = 'u8[65536]{0}', space=vmem, size = 0x10000, scoped, tag = 'input window, operand 3, single buffered']
    #allocation9 [shape = 's32[1]{0}', space=sflag, size = 0x4, scoped, tag = 'scoped memory for tpu_custom_call.1']
    #allocation10 [shape = 'u8[32768]{0}', space=vmem, size = 0x8000, scoped, tag = 'input window, operand 5, single buffered']
    #allocation11 [shape = 'u8[4096]{0}', space=vmem, size = 0x1000, scoped, tag = 'output window, operand 0, single buffered']
    %12 = vsyncpa [#allocation3], 0
    %13 = vsyncpa [#allocation6], 0
    %14 = vsyncpa [#allocation9], 0
    %15 = vsyncpa [#allocation4], 0
    // Predicated region
    $region2: #{tpu_custom_call.1} parent=1 // pred_check
      _
    $region3: #{tpu_custom_call.1} parent=1 // pred_check_branch
      %17 = sbr.rel (0) target = $region5
    $region4: #{tpu_custom_call.1} parent=1 // pred_region
      %19 = vsyncadd [#allocation3], 0
      %s21 = sshll.u32 %s0, 4
      %s22 = int_to_ptr.hbm [resolvable:$true] %s21
      %s23 = sshll.u32 [#allocation2], 4
      %s24 = int_to_ptr.vmem [resolvable:$true] %s23
      %26 = dma.hbm_to_vmem [thread:$0]  %s22, 64, %s24, [#allocation3]
    $region5: #{tpu_custom_call.1} parent=1 // pred_fallthru
      _
    // Predicated region
    $region6: #{tpu_custom_call.1} parent=1 // pred_check
      _
    $region7: #{tpu_custom_call.1} parent=1 // pred_check_branch
      %28 = sbr.rel (0) target = $region9
    $region8: #{tpu_custom_call.1} parent=1 // pred_region
      %30 = vsyncadd [#allocation6], 0
      %s31 = sshll.u32 %s1, 4
      %s32 = int_to_ptr.hbm [resolvable:$true] %s31
      %s33 = sshll.u32 [#allocation5], 4
      %s34 = int_to_ptr.vmem [resolvable:$true] %s33
      %39 = dma.hbm_to_vmem [thread:$0]  %s32, 512, %s34, [#allocation6], 128, 128, 8
    $region9: #{tpu_custom_call.1} parent=1 // pred_fallthru
      _
    // Predicated region
    $region10: #{tpu_custom_call.1} parent=1 // pred_check
      _
    $region11: #{tpu_custom_call.1} parent=1 // pred_check_branch
      %41 = sbr.rel (0) target = $region13
    $region12: #{tpu_custom_call.1} parent=1 // pred_region
      %43 = vsyncadd [#allocation6], 0
      %s45 = sshll.u32 %s2, 4
      %s46 = int_to_ptr.hbm [resolvable:$true] %s45
      %s47 = sshll.u32 [#allocation7], 4
      %s48 = int_to_ptr.vmem [resolvable:$true] %s47
      %50 = dma.hbm_to_vmem [thread:$0]  %s46, 32, %s48, [#allocation6]
    $region13: #{tpu_custom_call.1} parent=1 // pred_fallthru
      _
    // Predicated region
    $region14: #{tpu_custom_call.1} parent=1 // pred_check
      _
    $region15: #{tpu_custom_call.1} parent=1 // pred_check_branch
      %52 = sbr.rel (0) target = $region17
    $region16: #{tpu_custom_call.1} parent=1 // pred_region
      %54 = vsyncadd [#allocation9], 0
      %s55 = sshll.u32 %s3, 4
      %s56 = int_to_ptr.hbm [resolvable:$true] %s55
      %s57 = sshll.u32 [#allocation8], 4
      %s58 = int_to_ptr.vmem [resolvable:$true] %s57
      %63 = dma.hbm_to_vmem [thread:$0]  %s56, 2048, %s58, [#allocation9], 64, 64, 4
    $region17: #{tpu_custom_call.1} parent=1 // pred_fallthru
      _
    // Predicated region
    $region18: #{tpu_custom_call.1} parent=1 // pred_check
      _
    $region19: #{tpu_custom_call.1} parent=1 // pred_check_branch
      %65 = sbr.rel (0) target = $region21
    $region20: #{tpu_custom_call.1} parent=1 // pred_region
      _
    $region21: #{tpu_custom_call.1} parent=1 // pred_fallthru
      _
    // Predicated region
    $region22: #{tpu_custom_call.1} parent=1 // pred_check
      _
    $region23: #{tpu_custom_call.1} parent=1 // pred_check_branch
      %67 = sbr.rel (0) target = $region25
    $region24: #{tpu_custom_call.1} parent=1 // pred_region
      %69 = vsyncadd [#allocation9], 0
      %s70 = sshll.u32 %s5, 4
      %s71 = int_to_ptr.hbm [resolvable:$true] %s70
      %s72 = sshll.u32 [#allocation10], 4
      %s73 = int_to_ptr.vmem [resolvable:$true] %s72
      %78 = dma.hbm_to_vmem [thread:$0]  %s71, 1024, %s73, [#allocation9], 64, 64, 4
    $region25: #{tpu_custom_call.1} parent=1 // pred_fallthru
      _
    // Predicated region
    $region26: #{tpu_custom_call.1} parent=1 // pred_check
      _
    $region27: #{tpu_custom_call.1} parent=1 // pred_check_branch
      %80 = sbr.rel (0) target = $region29
    $region28: #{tpu_custom_call.1} parent=1 // pred_region
      _
    $region29: #{tpu_custom_call.1} parent=1 // pred_fallthru
      _
    // Predicated region
    $region30: #{tpu_custom_call.1} parent=1 // pred_check
      _
    $region31: #{tpu_custom_call.1} parent=1 // pred_check_branch
      %82 = sbr.rel (0) target = $region33
    $region32: #{tpu_custom_call.1} parent=1 // pred_region
      %84 = dma.done [#allocation3], 64
    $region33: #{tpu_custom_call.1} parent=1 // pred_fallthru
      _
    // Predicated region
    $region34: #{tpu_custom_call.1} parent=1 // pred_check
      _
    $region35: #{tpu_custom_call.1} parent=1 // pred_check_branch
      %86 = sbr.rel (0) target = $region37
    $region36: #{tpu_custom_call.1} parent=1 // pred_region
      %88 = dma.done [#allocation6], 512
    $region37: #{tpu_custom_call.1} parent=1 // pred_fallthru
      _
    // Predicated region
    $region38: #{tpu_custom_call.1} parent=1 // pred_check
      _
    $region39: #{tpu_custom_call.1} parent=1 // pred_check_branch
      %90 = sbr.rel (0) target = $region41
    $region40: #{tpu_custom_call.1} parent=1 // pred_region
      %92 = dma.done [#allocation6], 32
    $region41: #{tpu_custom_call.1} parent=1 // pred_fallthru
      _
    // Predicated region
    $region42: #{tpu_custom_call.1} parent=1 // pred_check
      _
    $region43: #{tpu_custom_call.1} parent=1 // pred_check_branch
      %94 = sbr.rel (0) target = $region45
    $region44: #{tpu_custom_call.1} parent=1 // pred_region
      %96 = dma.done [#allocation9], 2048
    $region45: #{tpu_custom_call.1} parent=1 // pred_fallthru
      _
    // Predicated region
    $region46: #{tpu_custom_call.1} parent=1 // pred_check
      _
    $region47: #{tpu_custom_call.1} parent=1 // pred_check_branch
      %98 = sbr.rel (0) target = $region49
    $region48: #{tpu_custom_call.1} parent=1 // pred_region
      %100 = dma.done [#allocation9], 1024
    $region49: #{tpu_custom_call.1} parent=1 // pred_fallthru
      _
    %v102 = vld [vmem:[#allocation2] sm:$0xf]
    %v103 = vld [vmem:[#allocation5] sm:$0xff]
    %v104 = vld [vmem:[#allocation5 + $0x8] sm:$0xff]
    %v105 = vld [vmem:[#allocation5 + $0x10] sm:$0xff]
    %v106 = vld [vmem:[#allocation5 + $0x18] sm:$0xff]
    %v107 = vld [vmem:[#allocation7] sm:$0x3]
    %v109 = vperm.slane %v107, 0
    %v110 = vperm.slane %v107, 1
    %v117 = vunpack.c.l.b16 %v103
    %v118 = vunpack.c.h.b16 %v103
    %v119 = vunpack.c.l.b16 %v104
    %v120 = vunpack.c.h.b16 %v104
    %v121 = vunpack.c.l.b16 %v105
    %v122 = vunpack.c.h.b16 %v105
    %v123 = vunpack.c.l.b16 %v106
    %v124 = vunpack.c.h.b16 %v106
    %v125 = vpack.c.b16 %v119, %v117
    %v126 = vpack.c.b16 %v120, %v118
    %v127 = vpack.c.b16 %v123, %v121
    %v128 = vpack.c.b16 %v124, %v122
    %vm133 = vcmask 261120
    %v135 = vsel %vm133, %v102, 0
    %137 = vmatpush.bf16.msra.mxu0 0
    %138 = vmatpush.bf16.msra.mxu0 0
    %139 = vmatpush.bf16.msra.mxu0 0
    %140 = vmatpush.bf16.msra.mxu0 0
    %141 = vmatpush.bf16.msra.mxu0 0
    %142 = vmatpush.bf16.msra.mxu0 0
    %143 = vmatpush.bf16.msra.mxu0 %v127
    %144 = vmatpush.bf16.msra.mxu0 %v125
    %145 = vmatmul.bf16.gmra.mxu0 %v135
    %v146 = vpop.f32.mrf.mxu0
    %v147 = vadd.f32 %v109, %v146
    %v148 = vpop.f32.mrf.mxu0
    %149 = vdwg.mxu0
    %150 = vmatpush.bf16.msra.mxu0 0
    %151 = vmatpush.bf16.msra.mxu0 0
    %152 = vmatpush.bf16.msra.mxu0 0
    %153 = vmatpush.bf16.msra.mxu0 0
    %154 = vmatpush.bf16.msra.mxu0 0
    %155 = vmatpush.bf16.msra.mxu0 0
    %156 = vmatpush.bf16.msra.mxu0 %v128
    %157 = vmatpush.bf16.msra.mxu0 %v126
    %158 = vmatmul.bf16.gmra.mxu0 %v135
    %v159 = vpop.f32.mrf.mxu0
    %v160 = vadd.f32 %v110, %v159
    %v161 = vpop.f32.mrf.mxu0
    %162 = vdwg.mxu0
    %v163 = vmax.f32 %v147, 0.0
    %v164 = vmax.f32 %v160, 0.0
    %v165 = vpack.c.bf16 %v163, %v163
    %v166 = vpack.c.bf16 %v164, %v164
    %v167 = vld [vmem:[#allocation8] sm:$0xf]
    %v168 = vld [vmem:[#allocation8 + $0x4] sm:$0xf]
    %v169 = vld [vmem:[#allocation8 + $0x8] sm:$0xf]
    %v170 = vld [vmem:[#allocation8 + $0xc] sm:$0xf]
    %v171 = vld [vmem:[#allocation8 + $0x10] sm:$0xf]
    %v172 = vld [vmem:[#allocation8 + $0x14] sm:$0xf]
    %v173 = vld [vmem:[#allocation8 + $0x18] sm:$0xf]
    %v174 = vld [vmem:[#allocation8 + $0x1c] sm:$0xf]
    %v175 = vld [vmem:[#allocation8 + $0x20] sm:$0xf]
    %v176 = vld [vmem:[#allocation8 + $0x24] sm:$0xf]
    %v177 = vld [vmem:[#allocation8 + $0x28] sm:$0xf]
    %v178 = vld [vmem:[#allocation8 + $0x2c] sm:$0xf]
    %v179 = vld [vmem:[#allocation8 + $0x30] sm:$0xf]
    %v180 = vld [vmem:[#allocation8 + $0x34] sm:$0xf]
    %v181 = vld [vmem:[#allocation8 + $0x38] sm:$0xf]
    %v182 = vld [vmem:[#allocation8 + $0x3c] sm:$0xf]
    %v183 = vld [vmem:[#allocation8 + $0x40] sm:$0xf]
    %v184 = vld [vmem:[#allocation8 + $0x44] sm:$0xf]
    %v185 = vld [vmem:[#allocation8 + $0x48] sm:$0xf]
    %v186 = vld [vmem:[#allocation8 + $0x4c] sm:$0xf]
    %v187 = vld [vmem:[#allocation8 + $0x50] sm:$0xf]
    %v188 = vld [vmem:[#allocation8 + $0x54] sm:$0xf]
    %v189 = vld [vmem:[#allocation8 + $0x58] sm:$0xf]
    %v190 = vld [vmem:[#allocation8 + $0x5c] sm:$0xf]
    %v191 = vld [vmem:[#allocation8 + $0x60] sm:$0xf]
    %v192 = vld [vmem:[#allocation8 + $0x64] sm:$0xf]
    %v193 = vld [vmem:[#allocation8 + $0x68] sm:$0xf]
    %v194 = vld [vmem:[#allocation8 + $0x6c] sm:$0xf]
    %v195 = vld [vmem:[#allocation8 + $0x70] sm:$0xf]
    %v196 = vld [vmem:[#allocation8 + $0x74] sm:$0xf]
    %v197 = vld [vmem:[#allocation8 + $0x78] sm:$0xf]
    %v198 = vld [vmem:[#allocation8 + $0x7c] sm:$0xf]
    %v199 = vld [vmem:[%s4] sm:$0x1]
    %v201 = vperm.slane %v199, 0
    %v235 = vunpack.c.l.b16 %v167
    %v236 = vunpack.c.l.b16 %v168
    %v237 = vunpack.c.l.b16 %v169
    %v238 = vunpack.c.l.b16 %v170
    %v239 = vunpack.c.l.b16 %v171
    %v240 = vunpack.c.l.b16 %v172
    %v241 = vunpack.c.l.b16 %v173
    %v242 = vunpack.c.l.b16 %v174
    %v243 = vunpack.c.l.b16 %v175
    %v244 = vunpack.c.l.b16 %v176
    %v245 = vunpack.c.l.b16 %v177
    %v246 = vunpack.c.l.b16 %v178
    %v247 = vunpack.c.l.b16 %v179
    %v248 = vunpack.c.l.b16 %v180
    %v249 = vunpack.c.l.b16 %v181
    %v250 = vunpack.c.l.b16 %v182
    %v251 = vunpack.c.l.b16 %v183
    %v252 = vunpack.c.l.b16 %v184
    %v253 = vunpack.c.l.b16 %v185
    %v254 = vunpack.c.l.b16 %v186
    %v255 = vunpack.c.l.b16 %v187
    %v256 = vunpack.c.l.b16 %v188
    %v257 = vunpack.c.l.b16 %v189
    %v258 = vunpack.c.l.b16 %v190
    %v259 = vunpack.c.l.b16 %v191
    %v260 = vunpack.c.l.b16 %v192
    %v261 = vunpack.c.l.b16 %v193
    %v262 = vunpack.c.l.b16 %v194
    %v263 = vunpack.c.l.b16 %v195
    %v264 = vunpack.c.l.b16 %v196
    %v265 = vunpack.c.l.b16 %v197
    %v266 = vunpack.c.l.b16 %v198
    %v267 = vpack.c.b16 %v236, %v235
    %v268 = vpack.c.b16 %v238, %v237
    %v269 = vpack.c.b16 %v240, %v239
    %v270 = vpack.c.b16 %v242, %v241
    %v271 = vpack.c.b16 %v244, %v243
    %v272 = vpack.c.b16 %v246, %v245
    %v273 = vpack.c.b16 %v248, %v247
    %v274 = vpack.c.b16 %v250, %v249
    %v275 = vpack.c.b16 %v252, %v251
    %v276 = vpack.c.b16 %v254, %v253
    %v277 = vpack.c.b16 %v256, %v255
    %v278 = vpack.c.b16 %v258, %v257
    %v279 = vpack.c.b16 %v260, %v259
    %v280 = vpack.c.b16 %v262, %v261
    %v281 = vpack.c.b16 %v264, %v263
    %v282 = vpack.c.b16 %v266, %v265
    %299 = vmatpush.bf16.msra.mxu0 %v274
    %300 = vmatpush.bf16.msra.mxu0 %v273
    %301 = vmatpush.bf16.msra.mxu0 %v272
    %302 = vmatpush.bf16.msra.mxu0 %v271
    %303 = vmatpush.bf16.msra.mxu0 %v270
    %304 = vmatpush.bf16.msra.mxu0 %v269
    %305 = vmatpush.bf16.msra.mxu0 %v268
    %306 = vmatpush.bf16.msra.mxu0 %v267
    %307 = vmatmul.bf16.gmra.mxu0 %v165
    %v308 = vpop.f32.mrf.mxu0
    %v309 = vadd.f32 %v201, %v308
    %v310 = vpop.f32.mrf.mxu0
    %311 = vdwg.mxu0
    %312 = vmatpush.bf16.msra.mxu0 %v282
    %313 = vmatpush.bf16.msra.mxu0 %v281
    %314 = vmatpush.bf16.msra.mxu0 %v280
    %315 = vmatpush.bf16.msra.mxu0 %v279
    %316 = vmatpush.bf16.msra.mxu0 %v278
    %317 = vmatpush.bf16.msra.mxu0 %v277
    %318 = vmatpush.bf16.msra.mxu0 %v276
    %319 = vmatpush.bf16.msra.mxu0 %v275
    %320 = vmatmul.bf16.gmra.mxu0 %v166
    %v321 = vpop.f32.mrf.mxu0
    %v322 = vadd.f32 %v309, %v321
    %v323 = vpop.f32.mrf.mxu0
    %324 = vdwg.mxu0
    %v325 = vmax.f32 %v322, 0.0
    %v326 = vpack.c.bf16 %v325, %v325
    %v327 = vld [vmem:[#allocation10] sm:$0xf]
    %v328 = vld [vmem:[#allocation10 + $0x4] sm:$0xf]
    %v329 = vld [vmem:[#allocation10 + $0x8] sm:$0xf]
    %v330 = vld [vmem:[#allocation10 + $0xc] sm:$0xf]
    %v331 = vld [vmem:[#allocation10 + $0x10] sm:$0xf]
    %v332 = vld [vmem:[#allocation10 + $0x14] sm:$0xf]
    %v333 = vld [vmem:[#allocation10 + $0x18] sm:$0xf]
    %v334 = vld [vmem:[#allocation10 + $0x1c] sm:$0xf]
    %v335 = vld [vmem:[#allocation10 + $0x20] sm:$0xf]
    %v336 = vld [vmem:[#allocation10 + $0x24] sm:$0xf]
    %v337 = vld [vmem:[#allocation10 + $0x28] sm:$0xf]
    %v338 = vld [vmem:[#allocation10 + $0x2c] sm:$0xf]
    %v339 = vld [vmem:[#allocation10 + $0x30] sm:$0xf]
    %v340 = vld [vmem:[#allocation10 + $0x34] sm:$0xf]
    %v341 = vld [vmem:[#allocation10 + $0x38] sm:$0xf]
    %v342 = vld [vmem:[#allocation10 + $0x3c] sm:$0xf]
    %v343 = vld [vmem:[%s6] sm:$0x1]
    %v345 = vperm.slane %v343, 0
    %v363 = vunpack.c.l.b16 %v327
    %v364 = vunpack.c.l.b16 %v328
    %v365 = vunpack.c.l.b16 %v329
    %v366 = vunpack.c.l.b16 %v330
    %v367 = vunpack.c.l.b16 %v331
    %v368 = vunpack.c.l.b16 %v332
    %v369 = vunpack.c.l.b16 %v333
    %v370 = vunpack.c.l.b16 %v334
    %v371 = vunpack.c.l.b16 %v335
    %v372 = vunpack.c.l.b16 %v336
    %v373 = vunpack.c.l.b16 %v337
    %v374 = vunpack.c.l.b16 %v338
    %v375 = vunpack.c.l.b16 %v339
    %v376 = vunpack.c.l.b16 %v340
    %v377 = vunpack.c.l.b16 %v341
    %v378 = vunpack.c.l.b16 %v342
    %v379 = vpack.c.b16 %v364, %v363
    %v380 = vpack.c.b16 %v366, %v365
    %v381 = vpack.c.b16 %v368, %v367
    %v382 = vpack.c.b16 %v370, %v369
    %v383 = vpack.c.b16 %v372, %v371
    %v384 = vpack.c.b16 %v374, %v373
    %v385 = vpack.c.b16 %v376, %v375
    %v386 = vpack.c.b16 %v378, %v377
    %395 = vmatpush.bf16.msra.mxu0 %v386
    %396 = vmatpush.bf16.msra.mxu0 %v385
    %397 = vmatpush.bf16.msra.mxu0 %v384
    %398 = vmatpush.bf16.msra.mxu0 %v383
    %399 = vmatpush.bf16.msra.mxu0 %v382
    %400 = vmatpush.bf16.msra.mxu0 %v381
    %401 = vmatpush.bf16.msra.mxu0 %v380
    %402 = vmatpush.bf16.msra.mxu0 %v379
    %403 = vmatmul.bf16.gmra.mxu0 %v326
    %v404 = vpop.f32.mrf.mxu0
    %v405 = vadd.f32 %v345, %v404
    %v406 = vpop.f32.mrf.mxu0
    %407 = vdwg.mxu0
    %408 = vst [vmem:[#allocation11] sm:$0xff] %v405
    // Predicated region
    $region50: #{tpu_custom_call.1} parent=1 // pred_check
      _
    $region51: #{tpu_custom_call.1} parent=1 // pred_check_branch
      %410 = sbr.rel (0) target = $region53
    $region52: #{tpu_custom_call.1} parent=1 // pred_region
      %412 = vsyncadd [#allocation4], 0
      %s414 = sshll.u32 [#allocation11], 4
      %s415 = int_to_ptr.vmem [resolvable:$true] %s414
      %s416 = sshll.u32 %s7, 4
      %s417 = int_to_ptr.hbm [resolvable:$true] %s416
      %419 = dma.vmem_to_hbm [thread:$0]  %s415, 128, %s417, [#allocation4]
    $region53: #{tpu_custom_call.1} parent=1 // pred_fallthru
      _
    // Predicated region
    $region54: #{tpu_custom_call.1} parent=1 // pred_check
      _
    $region55: #{tpu_custom_call.1} parent=1 // pred_check_branch
      %421 = sbr.rel (0) target = $region57
    $region56: #{tpu_custom_call.1} parent=1 // pred_region
      %423 = dma.done [#allocation4], 128
    $region57: #{tpu_custom_call.1} parent=1 // pred_fallthru
      _
    %424 = vsyncpa [#allocation3], 1
    %425 = vsyncpa [#allocation6], 1
    %426 = vsyncpa [#allocation9], 1
    %427 = vsyncpa [#allocation4], 1

</llo_original>
